<compile_context>
chip_gen: v7x
topology: tpu7x:2x2x1
jax: 0.10.0
libtpu: 0.0.40
codegen_flags: <defaults>
</compile_context>

<pallas_src>
import functools

import numpy as np
import jax
import jax.numpy as jnp
from jax.experimental import pallas as pl
from jax.experimental.pallas import tpu as pltpu


def _round_up(x, m):
    return ((x + m - 1) // m) * m


def _dft_basis(n_fft, n_bins, n_bins_pad):
    """Fused (cos | sin) real-DFT basis with the periodic Hann window folded in.

    Shape (2*n_bins_pad, n_fft), bf16.  Rows [0, n_bins) are cos, rows
    [n_bins_pad, n_bins_pad+n_bins) are -sin; padding rows are zero (they
    produce power 0 which is clamped to amin^2 and never affects the max).
    """
    n = np.arange(n_fft, dtype=np.float64)
    window = 0.5 - 0.5 * np.cos(2.0 * np.pi * n / n_fft)          # periodic hann
    k = np.arange(n_bins, dtype=np.float64)[:, None]
    ang = 2.0 * np.pi * k * n[None, :] / n_fft
    basis = np.zeros((2 * n_bins_pad, n_fft), dtype=np.float32)
    basis[:n_bins] = (np.cos(ang) * window).astype(np.float32)
    basis[n_bins_pad:n_bins_pad + n_bins] = (-np.sin(ang) * window).astype(np.float32)
    return jnp.asarray(basis, dtype=jnp.bfloat16)


def _spectrogram_kernel(frames_ref, basis_ref, out_ref, *, n_bins_pad):
    # frames_ref: (1, n_fft, n_frames_pad) bf16   (one batch item)
    # basis_ref : (2*n_bins_pad, n_fft)    bf16   (grid-resident constant)
    # out_ref   : (1, n_bins_pad, n_frames_pad) f32
    frames = frames_ref[0]
    basis = basis_ref[...]

    # Single fused MXU matmul -> (2*n_bins_pad, n_frames_pad) f32, freq-major.
    proj = jnp.dot(basis, frames, preferred_element_type=jnp.float32)
    re = proj[:n_bins_pad, :]
    im = proj[n_bins_pad:, :]
    power = re * re + im * im

    # amplitude_to_db(|S|, ref=max, amin=1e-5, top_db=80) in the power domain:
    #   10*log10(max(amin^2, power)) - 10*log10(max(amin^2, max power)),
    #   clamped at -top_db.  log goes to the EUP slot; single scalar max ref.
    log10_scale = np.float32(10.0 / np.log(10.0))
    db = jnp.log(jnp.maximum(power, np.float32(1e-10))) * log10_scale
    ref_db = jnp.max(db, axis=(0, 1), keepdims=True)   # per-item reference
    out_ref[0] = jnp.maximum(db - ref_db, np.float32(-80.0))


def spectrogram(x, n_fft):
    """x: (batch, length) float signal -> (batch, n_fft//2+1, n_frames) dB."""
    x = jnp.asarray(x, jnp.float32)
    batch, _ = x.shape
    hop = n_fft // 4
    n_bins = n_fft // 2 + 1
    n_bins_pad = _round_up(n_bins, 128)      # lane-dense bin dimension

    # center=True padding (reflect, classic librosa default).
    pad = n_fft // 2
    xp = jnp.pad(x, ((0, 0), (pad, pad)), mode="reflect")
    n_frames = 1 + (xp.shape[1] - n_fft) // hop
    n_frames_pad = _round_up(n_frames, 128)  # lane-dense time dimension

    # Build frames directly transposed: frames_t[b, i, t] = xp[b, t*hop + i]
    # -> the matmul emits freq-major output with no in-kernel transpose.
    idx = jnp.arange(n_fft)[:, None] + hop * jnp.arange(n_frames)[None, :]
    frames_t = xp[:, idx]                                   # (batch, n_fft, n_frames)
    frames_t = jnp.pad(frames_t, ((0, 0), (0, 0), (0, n_frames_pad - n_frames)))
    frames_t = frames_t.astype(jnp.bfloat16)

    basis = _dft_basis(n_fft, n_bins, n_bins_pad)           # (2*n_bins_pad, n_fft) bf16

    # VMEM budget (bases are pipelined as a constant; frames/out double-buffered).
    bytes_basis = int(basis.size) * 2
    bytes_frames = n_fft * n_frames_pad * 2
    bytes_out = n_bins_pad * n_frames_pad * 4
    bytes_proj = 2 * n_bins_pad * n_frames_pad * 4
    vmem_est = 2 * bytes_basis + 2 * bytes_frames + 2 * bytes_out + bytes_proj
    vmem_limit = int(min(max(2 * vmem_est, 32 * 1024 * 1024), 48 * 1024 * 1024))

    kernel = functools.partial(_spectrogram_kernel, n_bins_pad=n_bins_pad)

    out = pl.pallas_call(
        kernel,
        out_shape=jax.ShapeDtypeStruct((batch, n_bins_pad, n_frames_pad), jnp.float32),
        grid_spec=pltpu.PrefetchScalarGridSpec(
            num_scalar_prefetch=0,
            grid=(batch,),
            in_specs=[
                # one batch item per grid step
                pl.BlockSpec((1, n_fft, n_frames_pad), lambda b: (b, 0, 0)),
                # constant index_map: bases stay VMEM-resident, never re-DMAed
                pl.BlockSpec((2 * n_bins_pad, n_fft), lambda b: (0, 0)),
            ],
            out_specs=pl.BlockSpec((1, n_bins_pad, n_frames_pad), lambda b: (b, 0, 0)),
        ),
        compiler_params=pltpu.CompilerParams(
            dimension_semantics=("parallel",),   # megacore / v7x dual-TC sharding
            vmem_limit_bytes=vmem_limit,
        ),
    )(frames_t, basis)

    # Slice away the lane-padding back to the module's (n_bins, n_frames).
    return out[:, :n_bins, :n_frames]


def _reference_spectrogram(x, n_fft):
    """Pure-JAX f32 reference (rfft) for a sanity check."""
    x = jnp.asarray(x, jnp.float32)
    hop = n_fft // 4
    pad = n_fft // 2
    n = jnp.arange(n_fft)
    win = 0.5 - 0.5 * jnp.cos(2.0 * jnp.pi * n / n_fft)
    xp = jnp.pad(x, ((0, 0), (pad, pad)), mode="reflect")
    n_frames = 1 + (xp.shape[1] - n_fft) // hop
    idx = jnp.arange(n_frames)[:, None] * hop + jnp.arange(n_fft)[None, :]
    frames = xp[:, idx] * win[None, None, :]                # (B, T, n_fft)
    spec = jnp.fft.rfft(frames, axis=-1)
    power = jnp.abs(spec) ** 2
    db = 10.0 * jnp.log10(jnp.maximum(power, 1e-10))
    ref = jnp.max(db, axis=(1, 2), keepdims=True)
    db = jnp.maximum(db - ref, -80.0)
    return jnp.transpose(db, (0, 2, 1))                     # (B, n_bins, n_frames)


if __name__ == "__main__":
    # Small shapes consistent with the module: n_fft=256 -> 129 bins,
    # length=8000, hop=64 -> 126 frames (mirrors the module's 126).
    n_fft = 256
    batch = 2
    length = 8000

    key = jax.random.PRNGKey(0)
    x = jax.random.normal(key, (batch, length), dtype=jnp.float32)

    spec_fn = jax.jit(functools.partial(spectrogram, n_fft=n_fft))
    out = jax.block_until_ready(spec_fn(x))

    n_bins = n_fft // 2 + 1
    n_frames = 1 + length // (n_fft // 4)
    assert out.shape == (batch, n_bins, n_frames), out.shape

    ref = jax.block_until_ready(_reference_spectrogram(x, n_fft))
    mean_abs_err = float(jnp.mean(jnp.abs(out - ref)))
    assert np.isfinite(mean_abs_err) and mean_abs_err < 1.0, mean_abs_err

    print("KERNEL_OK")
</pallas_src>

<mosaic_0001>
module attributes {stable_mosaic.version = 11 : i64} {
  func.func @_spectrogram_kernel(%arg0: i32, %arg1: memref<1x256x128xbf16, #tpu.memory_space<vmem>>, %arg2: memref<512x256xbf16, #tpu.memory_space<vmem>>, %arg3: memref<1x256x128xf32, #tpu.memory_space<vmem>>) attributes {dimension_semantics = [#tpu.dimension_semantics<parallel>], iteration_bounds = array<i64: 2>, scalar_prefetch = 0 : i64, scratch_operands = 0 : i64, tpu.core_type = #tpu.core_type<tc>, window_params = [{transform_indices = @transform_0, window_bounds = array<i64: 1, 256, 128>}, {pipeline_mode = #tpu.pipeline_mode<synchronous>, transform_indices = @transform_1, window_bounds = array<i64: 512, 256>}, {transform_indices = @transform_2, window_bounds = array<i64: 1, 256, 128>}]} {
    %c0 = arith.constant 0 : index
    %c0_0 = arith.constant 0 : index
    %c0_1 = arith.constant 0 : index
    %0 = vector.load %arg1[%c0, %c0_0, %c0_1] : memref<1x256x128xbf16, #tpu.memory_space<vmem>>, vector<1x256x128xbf16>
    %1 = vector.shape_cast %0 : vector<1x256x128xbf16> to vector<256x128xbf16>
    %c0_2 = arith.constant 0 : index
    %c0_3 = arith.constant 0 : index
    %2 = vector.load %arg2[%c0_2, %c0_3] : memref<512x256xbf16, #tpu.memory_space<vmem>>, vector<512x256xbf16>
    %cst = arith.constant dense<0.000000e+00> : vector<512x128xf32>
    %3 = tpu.matmul %2, %1, %cst {dimension_numbers = #tpu.dot_dimension_numbers<[1], [0], [0], [1], [0, 0, 1, 1], [], []>} : vector<512x256xbf16>, vector<256x128xbf16>, vector<512x128xf32> -> vector<512x128xf32>
    %4 = vector.extract_strided_slice %3 {offsets = [0, 0], sizes = [256, 128], strides = [1, 1]} : vector<512x128xf32> to vector<256x128xf32>
    %5 = vector.extract_strided_slice %3 {offsets = [256, 0], sizes = [256, 128], strides = [1, 1]} : vector<512x128xf32> to vector<256x128xf32>
    %6 = arith.mulf %4, %4 : vector<256x128xf32>
    %7 = arith.mulf %5, %5 : vector<256x128xf32>
    %8 = arith.addf %6, %7 : vector<256x128xf32>
    %cst_4 = arith.constant 1.000000e-10 : f32
    %9 = vector.broadcast %cst_4 : f32 to vector<256x128xf32>
    %10 = arith.maximumf %8, %9 : vector<256x128xf32>
    %11 = math.log %10 : vector<256x128xf32>
    %cst_5 = arith.constant 4.34294462 : f32
    %12 = vector.broadcast %cst_5 : f32 to vector<256x128xf32>
    %13 = arith.mulf %11, %12 : vector<256x128xf32>
    %14 = vector.shape_cast %13 : vector<256x128xf32> to vector<1x256x128xf32>
    %cst_6 = arith.constant dense<0xFF800000> : vector<1xf32>
    %15 = vector.multi_reduction <maximumf>, %14, %cst_6 [1, 2] : vector<1x256x128xf32> to vector<1xf32>
    %16 = vector.shape_cast %15 : vector<1xf32> to vector<1x1x1xf32>
    %17 = vector.extract %16[0, 0, 0] : f32 from vector<1x1x1xf32>
    %18 = vector.broadcast %17 : f32 to vector<1x1xf32>
    %19 = vector.broadcast %18 : vector<1x1xf32> to vector<256x128xf32>
    %20 = arith.subf %13, %19 : vector<256x128xf32>
    %cst_7 = arith.constant -8.000000e+01 : f32
    %21 = vector.broadcast %cst_7 : f32 to vector<256x128xf32>
    %22 = arith.maximumf %20, %21 : vector<256x128xf32>
    %c0_8 = arith.constant 0 : index
    %c0_9 = arith.constant 0 : index
    %c0_10 = arith.constant 0 : index
    %23 = vector.load %arg3[%c0_8, %c0_9, %c0_10] : memref<1x256x128xf32, #tpu.memory_space<vmem>>, vector<1x256x128xf32>
    %24 = vector.shape_cast %23 : vector<1x256x128xf32> to vector<256x128xf32>
    %25 = vector.shape_cast %22 : vector<256x128xf32> to vector<1x256x128xf32>
    tpu.vector_store %arg3[%c0_8, %c0_9, %c0_10], %25 {strides = array<i32>} : memref<1x256x128xf32, #tpu.memory_space<vmem>>, vector<1x256x128xf32>,
    return
  }
  func.func @transform_0(%arg0: i32) -> (i32, i32, i32) {
    %c0_i32 = arith.constant 0 : i32
    %c0_i32_0 = arith.constant 0 : i32
    %c0_i32_1 = arith.constant 0 : i32
    return %arg0, %c0_i32, %c0_i32_0 : i32, i32, i32
  }
  func.func @transform_1(%arg0: i32) -> (i32, i32) {
    %c0_i32 = arith.constant 0 : i32
    %c0_i32_0 = arith.constant 0 : i32
    %c0_i32_1 = arith.constant 0 : i32
    return %c0_i32, %c0_i32_0 : i32, i32
  }
  func.func @transform_2(%arg0: i32) -> (i32, i32, i32) {
    %c0_i32 = arith.constant 0 : i32
    %c0_i32_0 = arith.constant 0 : i32
    %c0_i32_1 = arith.constant 0 : i32
    return %arg0, %c0_i32, %c0_i32_0 : i32, i32, i32
  }
}

</mosaic_0001>

<llo_original>
// kernel: spectrogram.1
$region0: #{spectrogram.1}
  #allocation0 [shape = 'u32[]', space=smem, size = 0x4, offset = 0x4, fixed_abs, tag = 'smem constant byte address 0x4 - core index']
  #allocation1 [shape = 'u32[144,128]{1,0:T(1,128)}', space=vmem, size = 0x12000, scoped, tag = 'internal scratch']
  %s0 = inlined_call_operand.vmem [shape: bf16[2,256,128], index: 0, kind: input, shape index: {}]
  %s1 = inlined_call_operand.vmem [shape: bf16[512,256], index: 1, kind: input, shape index: {}]
  %s2 = inlined_call_operand.vmem [shape: f32[2,256,128], index: 2, kind: output, shape index: {}]
  %s3 = sld [smem:[#allocation0]]
  $region41: #{spectrogram.1} parent=0
    _
  %s5 = ssub.s32 1, %s3
  %s6 = scalar_select 0, %s5, %s3
  loop: start=0, step=1, limit=4
  $region2: #{spectrogram.1} parent=0 // loop_pre_header
    _
  $region3: #{spectrogram.1} parent=0 // loop_header
    %s8 = sphi 0, %s12
    %p9 = scmp.ge.s32.totalorder %s8, 4
    %s18 = sphi 0, %s20
    %s21 = sphi 0, %s18
    %s22 = sphi 0, %s21
    %s38 = sphi 0, %s22
    %s42 = sphi 0, %s42
    %s44 = sphi 0, %s42
    %s45 = sphi 0, %s44
    %s59 = sphi 0, %s45
    %s65 = sphi 0, %s67
    %s68 = sphi 0, %s65
    %s69 = sphi 0, %s68
    %s85 = sphi 0, %s69
  $region4: #{spectrogram.1} parent=0 // loop_header_branch
    %11 = sbr.rel (%p9) target = $region8
  $region5: #{spectrogram.1} parent=0 // loop_body
    %s13 = ssub.s32 %s8, 1
    %s14 = ssub.s32 %s8, 2
    %s15 = sadd.s32 %s8, 1
    %s16 = ssub.s32 %s8, %s15
    %p17 = scmp.eq.s32.totalorder %s16, 0
    %s19 = sadd.s32 %s18, 1
    %s20 = scalar_select %p17, %s18, %s19
    %p23 = pneg %p17
    %p24 = scmp.eq.s32.totalorder %s8, 1
    %p25 = por %p23, %p24
    %p26 = scmp.ne.s32.totalorder %s18, %s21
    %p27 = scmp.eq.s32.totalorder %s8, 0
    %p28 = por %p26, %p27
    %p29 = scmp.ne.s32.totalorder %s18, %s21
    %p30 = scmp.eq.s32.totalorder %s13, 1
    %p31 = por %p29, %p30
    %p32 = scmp.ne.s32.totalorder %s21, %s22
    %p33 = scmp.eq.s32.totalorder %s13, 0
    %p34 = por %p32, %p33
    %p35 = scmp.ne.s32.totalorder %s21, %s22
    %p36 = scmp.eq.s32.totalorder %s14, 1
    %p37 = por %p35, %p36
    %p39 = scmp.ne.s32.totalorder %s22, %s38
    %p40 = scmp.eq.s32.totalorder %s14, 0
    %p41 = por %p39, %p40
    %s43 = sadd.s32 %s42, 1
    %p46 = scmp.eq.s32.totalorder %s8, 1
    %p47 = scmp.ne.s32.totalorder %s42, %s44
    %p48 = scmp.eq.s32.totalorder %s8, 0
    %p49 = por %p47, %p48
    %p50 = scmp.ne.s32.totalorder %s42, %s44
    %p51 = scmp.eq.s32.totalorder %s13, 1
    %p52 = por %p50, %p51
    %p53 = scmp.ne.s32.totalorder %s44, %s45
    %p54 = scmp.eq.s32.totalorder %s13, 0
    %p55 = por %p53, %p54
    %p56 = scmp.ne.s32.totalorder %s44, %s45
    %p57 = scmp.eq.s32.totalorder %s14, 1
    %p58 = por %p56, %p57
    %p60 = scmp.ne.s32.totalorder %s45, %s59
    %p61 = scmp.eq.s32.totalorder %s14, 0
    %p62 = por %p60, %p61
    %s63 = ssub.s32 %s8, %s15
    %p64 = scmp.eq.s32.totalorder %s63, 0
    %s66 = sadd.s32 %s65, 1
    %s67 = scalar_select %p64, %s65, %s66
    %p70 = pneg %p64
    %p71 = scmp.eq.s32.totalorder %s8, 1
    %p72 = por %p70, %p71
    %p73 = scmp.ne.s32.totalorder %s65, %s68
    %p74 = scmp.eq.s32.totalorder %s8, 0
    %p75 = por %p73, %p74
    %p76 = scmp.ne.s32.totalorder %s65, %s68
    %p77 = scmp.eq.s32.totalorder %s13, 1
    %p78 = por %p76, %p77
    %p79 = scmp.ne.s32.totalorder %s68, %s69
    %p80 = scmp.eq.s32.totalorder %s13, 0
    %p81 = por %p79, %p80
    %p82 = scmp.ne.s32.totalorder %s68, %s69
    %p83 = scmp.eq.s32.totalorder %s14, 1
    %p84 = por %p82, %p83
    %p86 = scmp.ne.s32.totalorder %s69, %s85
    %p87 = scmp.eq.s32.totalorder %s14, 0
    %p88 = por %p86, %p87
    %p89 = scmp.le.s32.totalorder 1, %s8
    %p90 = scmp.lt.s32.totalorder %s8, 3
    %p91 = pnand %p89, %p90
    %p92 = pneg %p91
    // Predicated region
    $region9: #{spectrogram.1} parent=5 // pred_check
      _
    $region10: #{spectrogram.1} parent=5 // pred_check_branch
      %94 = sbr.rel (%p91) target = $region12
    $region11: #{spectrogram.1} parent=5 // pred_region
      %s95 = ssub.s32 %s8, 1
      // Predicated region
      $region13: #{spectrogram.1} parent=11 // pred_check
        %p96 = pneg %p55
      $region14: #{spectrogram.1} parent=11 // pred_check_branch
        %98 = sbr.rel (%p96) target = $region16
      $region15: #{spectrogram.1} parent=11 // pred_region
        _
      $region16: #{spectrogram.1} parent=11 // pred_fallthru
        _
    $region12: #{spectrogram.1} parent=5 // pred_fallthru
      _
    %p99 = scmp.lt.s32.totalorder %s8, 2
    // Predicated region
    $region17: #{spectrogram.1} parent=5 // pred_check
      %p100 = pneg %p99
    $region18: #{spectrogram.1} parent=5 // pred_check_branch
      %102 = sbr.rel (%p100) target = $region20
    $region19: #{spectrogram.1} parent=5 // pred_region
      // Predicated region
      $region21: #{spectrogram.1} parent=19 // pred_check
        %p103 = pneg %p28
      $region22: #{spectrogram.1} parent=19 // pred_check_branch
        %105 = sbr.rel (%p103) target = $region24
      $region23: #{spectrogram.1} parent=19 // pred_region
        %p106 = scmp.lt.s32.totalorder %s8, 1
        %s107 = scalar_select %p106, %s8, 1
        %s108 = smul.addr %s107, 32
        %s109 = smul.addr %s108, 4
        %s110 = scalar_lea.vmem %s0, %s109
      $region24: #{spectrogram.1} parent=19 // pred_fallthru
        _
    $region20: #{spectrogram.1} parent=5 // pred_fallthru
      _
    %p111 = scmp.le.s32.totalorder 1, %s8
    %p112 = scmp.lt.s32.totalorder %s8, 3
    %p113 = pnand %p111, %p112
    %p114 = pneg %p113
    // Predicated region
    $region25: #{spectrogram.1} parent=5 // pred_check
      _
    $region26: #{spectrogram.1} parent=5 // pred_check_branch
      %116 = sbr.rel (%p113) target = $region28
    $region27: #{spectrogram.1} parent=5 // pred_region
      %s117 = ssub.s32 %s8, 1
      %p118 = scmp.lt.s32.totalorder %s13, 1
      %s119 = scalar_select %p118, %s13, 1
      %s120 = smul.addr %s119, 32
      %s121 = smul.addr %s120, 4
      %s122 = scalar_lea.vmem %s0, %s121
      %p123 = pneg %p34
      %p124 = pneg %p31
      %p125 = pneg %p55
      %p126 = pneg %p52
      %p127 = pneg %p81
      %p128 = pneg %p78
      %p129 = scmp.lt.s32.totalorder %s13, 1
      %s130 = scalar_select %p129, %s13, 1
      %s131 = smul.addr %s130, 32
      %s132 = smul.addr %s131, 8
      %s133 = scalar_lea.vmem %s2, %s132
      %p134 = scmp.lt.s32.totalorder %s13, 1
      %s135 = scalar_select %p134, %s13, 1
      %s136 = smul.addr %s135, 32
      %s137 = smul.addr %s136, 4
      %s138 = scalar_lea.vmem %s0, %s137
      %p139 = scmp.lt.s32.totalorder %s13, 1
      %s140 = scalar_select %p139, %s13, 1
      %s141 = smul.addr %s140, 32
      %s142 = smul.addr %s141, 8
      %s143 = scalar_lea.vmem %s2, %s142
      %v145 = vld [vmem:[%s138] sm:$0xf]
      %v146 = vld [vmem:[%s138 + $0x4] sm:$0xf]
      %v147 = vld [vmem:[%s138 + $0x8] sm:$0xf]
      %v148 = vld [vmem:[%s138 + $0xc] sm:$0xf]
      %v149 = vld [vmem:[%s138 + $0x10] sm:$0xf]
      %v150 = vld [vmem:[%s138 + $0x14] sm:$0xf]
      %v151 = vld [vmem:[%s138 + $0x18] sm:$0xf]
      %v152 = vld [vmem:[%s138 + $0x1c] sm:$0xf]
      %v153 = vld [vmem:[%s138 + $0x20] sm:$0xf]
      %v154 = vld [vmem:[%s138 + $0x24] sm:$0xf]
      %v155 = vld [vmem:[%s138 + $0x28] sm:$0xf]
      %v156 = vld [vmem:[%s138 + $0x2c] sm:$0xf]
      %v157 = vld [vmem:[%s138 + $0x30] sm:$0xf]
      %v158 = vld [vmem:[%s138 + $0x34] sm:$0xf]
      %v159 = vld [vmem:[%s138 + $0x38] sm:$0xf]
      %v160 = vld [vmem:[%s138 + $0x3c] sm:$0xf]
      %v161 = vld [vmem:[%s138 + $0x40] sm:$0xf]
      %v162 = vld [vmem:[%s138 + $0x44] sm:$0xf]
      %v163 = vld [vmem:[%s138 + $0x48] sm:$0xf]
      %v164 = vld [vmem:[%s138 + $0x4c] sm:$0xf]
      %v165 = vld [vmem:[%s138 + $0x50] sm:$0xf]
      %v166 = vld [vmem:[%s138 + $0x54] sm:$0xf]
      %v167 = vld [vmem:[%s138 + $0x58] sm:$0xf]
      %v168 = vld [vmem:[%s138 + $0x5c] sm:$0xf]
      %v169 = vld [vmem:[%s138 + $0x60] sm:$0xf]
      %v170 = vld [vmem:[%s138 + $0x64] sm:$0xf]
      %v171 = vld [vmem:[%s138 + $0x68] sm:$0xf]
      %v172 = vld [vmem:[%s138 + $0x6c] sm:$0xf]
      %v173 = vld [vmem:[%s138 + $0x70] sm:$0xf]
      %v174 = vld [vmem:[%s138 + $0x74] sm:$0xf]
      %v175 = vld [vmem:[%s138 + $0x78] sm:$0xf]
      %v176 = vld [vmem:[%s138 + $0x7c] sm:$0xf]
      %v177 = vld [vmem:[%s1] sm:$0xff]
      %v178 = vld [vmem:[%s1 + $0x8] sm:$0xff]
      %v179 = vld [vmem:[%s1 + $0x10] sm:$0xff]
      %v180 = vld [vmem:[%s1 + $0x18] sm:$0xff]
      %v181 = vld [vmem:[%s1 + $0x20] sm:$0xff]
      %v182 = vld [vmem:[%s1 + $0x28] sm:$0xff]
      %v183 = vld [vmem:[%s1 + $0x30] sm:$0xff]
      %v184 = vld [vmem:[%s1 + $0x38] sm:$0xff]
      %v185 = vld [vmem:[%s1 + $0x40] sm:$0xff]
      %v186 = vld [vmem:[%s1 + $0x48] sm:$0xff]
      %v187 = vld [vmem:[%s1 + $0x50] sm:$0xff]
      %v188 = vld [vmem:[%s1 + $0x58] sm:$0xff]
      %v189 = vld [vmem:[%s1 + $0x60] sm:$0xff]
      %v190 = vld [vmem:[%s1 + $0x68] sm:$0xff]
      %v191 = vld [vmem:[%s1 + $0x70] sm:$0xff]
      %v192 = vld [vmem:[%s1 + $0x78] sm:$0xff]
      %v193 = vld [vmem:[%s1 + $0x80] sm:$0xff]
      %v194 = vld [vmem:[%s1 + $0x88] sm:$0xff]
      %v195 = vld [vmem:[%s1 + $0x90] sm:$0xff]
      %v196 = vld [vmem:[%s1 + $0x98] sm:$0xff]
      %v197 = vld [vmem:[%s1 + $0xa0] sm:$0xff]
      %v198 = vld [vmem:[%s1 + $0xa8] sm:$0xff]
      %v199 = vld [vmem:[%s1 + $0xb0] sm:$0xff]
      %v200 = vld [vmem:[%s1 + $0xb8] sm:$0xff]
      %v201 = vld [vmem:[%s1 + $0xc0] sm:$0xff]
      %v202 = vld [vmem:[%s1 + $0xc8] sm:$0xff]
      %v203 = vld [vmem:[%s1 + $0xd0] sm:$0xff]
      %v204 = vld [vmem:[%s1 + $0xd8] sm:$0xff]
      %v205 = vld [vmem:[%s1 + $0xe0] sm:$0xff]
      %v206 = vld [vmem:[%s1 + $0xe8] sm:$0xff]
      %v207 = vld [vmem:[%s1 + $0xf0] sm:$0xff]
      %v208 = vld [vmem:[%s1 + $0xf8] sm:$0xff]
      %v209 = vld [vmem:[%s1 + $0x100] sm:$0xff]
      %v210 = vld [vmem:[%s1 + $0x108] sm:$0xff]
      %v211 = vld [vmem:[%s1 + $0x110] sm:$0xff]
      %v212 = vld [vmem:[%s1 + $0x118] sm:$0xff]
      %v213 = vld [vmem:[%s1 + $0x120] sm:$0xff]
      %v214 = vld [vmem:[%s1 + $0x128] sm:$0xff]
      %v215 = vld [vmem:[%s1 + $0x130] sm:$0xff]
      %v216 = vld [vmem:[%s1 + $0x138] sm:$0xff]
      %v217 = vld [vmem:[%s1 + $0x140] sm:$0xff]
      %v218 = vld [vmem:[%s1 + $0x148] sm:$0xff]
      %v219 = vld [vmem:[%s1 + $0x150] sm:$0xff]
      %v220 = vld [vmem:[%s1 + $0x158] sm:$0xff]
      %v221 = vld [vmem:[%s1 + $0x160] sm:$0xff]
      %v222 = vld [vmem:[%s1 + $0x168] sm:$0xff]
      %v223 = vld [vmem:[%s1 + $0x170] sm:$0xff]
      %v224 = vld [vmem:[%s1 + $0x178] sm:$0xff]
      %v225 = vld [vmem:[%s1 + $0x180] sm:$0xff]
      %v226 = vld [vmem:[%s1 + $0x188] sm:$0xff]
      %v227 = vld [vmem:[%s1 + $0x190] sm:$0xff]
      %v228 = vld [vmem:[%s1 + $0x198] sm:$0xff]
      %v229 = vld [vmem:[%s1 + $0x1a0] sm:$0xff]
      %v230 = vld [vmem:[%s1 + $0x1a8] sm:$0xff]
      %v231 = vld [vmem:[%s1 + $0x1b0] sm:$0xff]
      %v232 = vld [vmem:[%s1 + $0x1b8] sm:$0xff]
      %v233 = vld [vmem:[%s1 + $0x1c0] sm:$0xff]
      %v234 = vld [vmem:[%s1 + $0x1c8] sm:$0xff]
      %v235 = vld [vmem:[%s1 + $0x1d0] sm:$0xff]
      %v236 = vld [vmem:[%s1 + $0x1d8] sm:$0xff]
      %v237 = vld [vmem:[%s1 + $0x1e0] sm:$0xff]
      %v238 = vld [vmem:[%s1 + $0x1e8] sm:$0xff]
      %v239 = vld [vmem:[%s1 + $0x1f0] sm:$0xff]
      %v240 = vld [vmem:[%s1 + $0x1f8] sm:$0xff]
      %v305 = vunpack.c.l.b16 %v177
      %v306 = vunpack.c.h.b16 %v177
      %v307 = vunpack.c.l.b16 %v178
      %v308 = vunpack.c.h.b16 %v178
      %v309 = vunpack.c.l.b16 %v179
      %v310 = vunpack.c.h.b16 %v179
      %v311 = vunpack.c.l.b16 %v180
      %v312 = vunpack.c.h.b16 %v180
      %v313 = vunpack.c.l.b16 %v181
      %v314 = vunpack.c.h.b16 %v181
      %v315 = vunpack.c.l.b16 %v182
      %v316 = vunpack.c.h.b16 %v182
      %v317 = vunpack.c.l.b16 %v183
      %v318 = vunpack.c.h.b16 %v183
      %v319 = vunpack.c.l.b16 %v184
      %v320 = vunpack.c.h.b16 %v184
      %v321 = vunpack.c.l.b16 %v185
      %v322 = vunpack.c.h.b16 %v185
      %v323 = vunpack.c.l.b16 %v186
      %v324 = vunpack.c.h.b16 %v186
      %v325 = vunpack.c.l.b16 %v187
      %v326 = vunpack.c.h.b16 %v187
      %v327 = vunpack.c.l.b16 %v188
      %v328 = vunpack.c.h.b16 %v188
      %v329 = vunpack.c.l.b16 %v189
      %v330 = vunpack.c.h.b16 %v189
      %v331 = vunpack.c.l.b16 %v190
      %v332 = vunpack.c.h.b16 %v190
      %v333 = vunpack.c.l.b16 %v191
      %v334 = vunpack.c.h.b16 %v191
      %v335 = vunpack.c.l.b16 %v192
      %v336 = vunpack.c.h.b16 %v192
      %v337 = vunpack.c.l.b16 %v193
      %v338 = vunpack.c.h.b16 %v193
      %v339 = vunpack.c.l.b16 %v194
      %v340 = vunpack.c.h.b16 %v194
      %v341 = vunpack.c.l.b16 %v195
      %v342 = vunpack.c.h.b16 %v195
      %v343 = vunpack.c.l.b16 %v196
      %v344 = vunpack.c.h.b16 %v196
      %v345 = vunpack.c.l.b16 %v197
      %v346 = vunpack.c.h.b16 %v197
      %v347 = vunpack.c.l.b16 %v198
      %v348 = vunpack.c.h.b16 %v198
      %v349 = vunpack.c.l.b16 %v199
      %v350 = vunpack.c.h.b16 %v199
      %v351 = vunpack.c.l.b16 %v200
      %v352 = vunpack.c.h.b16 %v200
      %v353 = vunpack.c.l.b16 %v201
      %v354 = vunpack.c.h.b16 %v201
      %v355 = vunpack.c.l.b16 %v202
      %v356 = vunpack.c.h.b16 %v202
      %v357 = vunpack.c.l.b16 %v203
      %v358 = vunpack.c.h.b16 %v203
      %v359 = vunpack.c.l.b16 %v204
      %v360 = vunpack.c.h.b16 %v204
      %v361 = vunpack.c.l.b16 %v205
      %v362 = vunpack.c.h.b16 %v205
      %v363 = vunpack.c.l.b16 %v206
      %v364 = vunpack.c.h.b16 %v206
      %v365 = vunpack.c.l.b16 %v207
      %v366 = vunpack.c.h.b16 %v207
      %v367 = vunpack.c.l.b16 %v208
      %v368 = vunpack.c.h.b16 %v208
      %v369 = vunpack.c.l.b16 %v209
      %v370 = vunpack.c.h.b16 %v209
      %v371 = vunpack.c.l.b16 %v210
      %v372 = vunpack.c.h.b16 %v210
      %v373 = vunpack.c.l.b16 %v211
      %v374 = vunpack.c.h.b16 %v211
      %v375 = vunpack.c.l.b16 %v212
      %v376 = vunpack.c.h.b16 %v212
      %v377 = vunpack.c.l.b16 %v213
      %v378 = vunpack.c.h.b16 %v213
      %v379 = vunpack.c.l.b16 %v214
      %v380 = vunpack.c.h.b16 %v214
      %v381 = vunpack.c.l.b16 %v215
      %v382 = vunpack.c.h.b16 %v215
      %v383 = vunpack.c.l.b16 %v216
      %v384 = vunpack.c.h.b16 %v216
      %v385 = vunpack.c.l.b16 %v217
      %v386 = vunpack.c.h.b16 %v217
      %v387 = vunpack.c.l.b16 %v218
      %v388 = vunpack.c.h.b16 %v218
      %v389 = vunpack.c.l.b16 %v219
      %v390 = vunpack.c.h.b16 %v219
      %v391 = vunpack.c.l.b16 %v220
      %v392 = vunpack.c.h.b16 %v220
      %v393 = vunpack.c.l.b16 %v221
      %v394 = vunpack.c.h.b16 %v221
      %v395 = vunpack.c.l.b16 %v222
      %v396 = vunpack.c.h.b16 %v222
      %v397 = vunpack.c.l.b16 %v223
      %v398 = vunpack.c.h.b16 %v223
      %v399 = vunpack.c.l.b16 %v224
      %v400 = vunpack.c.h.b16 %v224
      %v401 = vunpack.c.l.b16 %v225
      %v402 = vunpack.c.h.b16 %v225
      %v403 = vunpack.c.l.b16 %v226
      %v404 = vunpack.c.h.b16 %v226
      %v405 = vunpack.c.l.b16 %v227
      %v406 = vunpack.c.h.b16 %v227
      %v407 = vunpack.c.l.b16 %v228
      %v408 = vunpack.c.h.b16 %v228
      %v409 = vunpack.c.l.b16 %v229
      %v410 = vunpack.c.h.b16 %v229
      %v411 = vunpack.c.l.b16 %v230
      %v412 = vunpack.c.h.b16 %v230
      %v413 = vunpack.c.l.b16 %v231
      %v414 = vunpack.c.h.b16 %v231
      %v415 = vunpack.c.l.b16 %v232
      %v416 = vunpack.c.h.b16 %v232
      %v417 = vunpack.c.l.b16 %v233
      %v418 = vunpack.c.h.b16 %v233
      %v419 = vunpack.c.l.b16 %v234
      %v420 = vunpack.c.h.b16 %v234
      %v421 = vunpack.c.l.b16 %v235
      %v422 = vunpack.c.h.b16 %v235
      %v423 = vunpack.c.l.b16 %v236
      %v424 = vunpack.c.h.b16 %v236
      %v425 = vunpack.c.l.b16 %v237
      %v426 = vunpack.c.h.b16 %v237
      %v427 = vunpack.c.l.b16 %v238
      %v428 = vunpack.c.h.b16 %v238
      %v429 = vunpack.c.l.b16 %v239
      %v430 = vunpack.c.h.b16 %v239
      %v431 = vunpack.c.l.b16 %v240
      %v432 = vunpack.c.h.b16 %v240
      %v433 = vpack.c.b16 %v307, %v305
      %v434 = vpack.c.b16 %v308, %v306
      %v435 = vpack.c.b16 %v311, %v309
      %v436 = vpack.c.b16 %v312, %v310
      %v437 = vpack.c.b16 %v315, %v313
      %v438 = vpack.c.b16 %v316, %v314
      %v439 = vpack.c.b16 %v319, %v317
      %v440 = vpack.c.b16 %v320, %v318
      %v441 = vpack.c.b16 %v323, %v321
      %v442 = vpack.c.b16 %v324, %v322
      %v443 = vpack.c.b16 %v327, %v325
      %v444 = vpack.c.b16 %v328, %v326
      %v445 = vpack.c.b16 %v331, %v329
      %v446 = vpack.c.b16 %v332, %v330
      %v447 = vpack.c.b16 %v335, %v333
      %v448 = vpack.c.b16 %v336, %v334
      %v449 = vpack.c.b16 %v339, %v337
      %v450 = vpack.c.b16 %v340, %v338
      %v451 = vpack.c.b16 %v343, %v341
      %v452 = vpack.c.b16 %v344, %v342
      %v453 = vpack.c.b16 %v347, %v345
      %v454 = vpack.c.b16 %v348, %v346
      %v455 = vpack.c.b16 %v351, %v349
      %v456 = vpack.c.b16 %v352, %v350
      %v457 = vpack.c.b16 %v355, %v353
      %v458 = vpack.c.b16 %v356, %v354
      %v459 = vpack.c.b16 %v359, %v357
      %v460 = vpack.c.b16 %v360, %v358
      %v461 = vpack.c.b16 %v363, %v361
      %v462 = vpack.c.b16 %v364, %v362
      %v463 = vpack.c.b16 %v367, %v365
      %v464 = vpack.c.b16 %v368, %v366
      %v465 = vpack.c.b16 %v371, %v369
      %v466 = vpack.c.b16 %v372, %v370
      %v467 = vpack.c.b16 %v375, %v373
      %v468 = vpack.c.b16 %v376, %v374
      %v469 = vpack.c.b16 %v379, %v377
      %v470 = vpack.c.b16 %v380, %v378
      %v471 = vpack.c.b16 %v383, %v381
      %v472 = vpack.c.b16 %v384, %v382
      %v473 = vpack.c.b16 %v387, %v385
      %v474 = vpack.c.b16 %v388, %v386
      %v475 = vpack.c.b16 %v391, %v389
      %v476 = vpack.c.b16 %v392, %v390
      %v477 = vpack.c.b16 %v395, %v393
      %v478 = vpack.c.b16 %v396, %v394
      %v479 = vpack.c.b16 %v399, %v397
      %v480 = vpack.c.b16 %v400, %v398
      %v481 = vpack.c.b16 %v403, %v401
      %v482 = vpack.c.b16 %v404, %v402
      %v483 = vpack.c.b16 %v407, %v405
      %v484 = vpack.c.b16 %v408, %v406
      %v485 = vpack.c.b16 %v411, %v409
      %v486 = vpack.c.b16 %v412, %v410
      %v487 = vpack.c.b16 %v415, %v413
      %v488 = vpack.c.b16 %v416, %v414
      %v489 = vpack.c.b16 %v419, %v417
      %v490 = vpack.c.b16 %v420, %v418
      %v491 = vpack.c.b16 %v423, %v421
      %v492 = vpack.c.b16 %v424, %v422
      %v493 = vpack.c.b16 %v427, %v425
      %v494 = vpack.c.b16 %v428, %v426
      %v495 = vpack.c.b16 %v431, %v429
      %v496 = vpack.c.b16 %v432, %v430
      %v593 = vunpack.c.l.b16 %v145
      %v594 = vunpack.c.l.b16 %v146
      %v595 = vunpack.c.l.b16 %v147
      %v596 = vunpack.c.l.b16 %v148
      %v597 = vunpack.c.l.b16 %v149
      %v598 = vunpack.c.l.b16 %v150
      %v599 = vunpack.c.l.b16 %v151
      %v600 = vunpack.c.l.b16 %v152
      %v601 = vunpack.c.l.b16 %v153
      %v602 = vunpack.c.l.b16 %v154
      %v603 = vunpack.c.l.b16 %v155
      %v604 = vunpack.c.l.b16 %v156
      %v605 = vunpack.c.l.b16 %v157
      %v606 = vunpack.c.l.b16 %v158
      %v607 = vunpack.c.l.b16 %v159
      %v608 = vunpack.c.l.b16 %v160
      %v609 = vunpack.c.l.b16 %v161
      %v610 = vunpack.c.l.b16 %v162
      %v611 = vunpack.c.l.b16 %v163
      %v612 = vunpack.c.l.b16 %v164
      %v613 = vunpack.c.l.b16 %v165
      %v614 = vunpack.c.l.b16 %v166
      %v615 = vunpack.c.l.b16 %v167
      %v616 = vunpack.c.l.b16 %v168
      %v617 = vunpack.c.l.b16 %v169
      %v618 = vunpack.c.l.b16 %v170
      %v619 = vunpack.c.l.b16 %v171
      %v620 = vunpack.c.l.b16 %v172
      %v621 = vunpack.c.l.b16 %v173
      %v622 = vunpack.c.l.b16 %v174
      %v623 = vunpack.c.l.b16 %v175
      %v624 = vunpack.c.l.b16 %v176
      %v625 = vpack.c.b16 %v594, %v593
      %v626 = vpack.c.b16 %v596, %v595
      %v627 = vpack.c.b16 %v598, %v597
      %v628 = vpack.c.b16 %v600, %v599
      %v629 = vpack.c.b16 %v602, %v601
      %v630 = vpack.c.b16 %v604, %v603
      %v631 = vpack.c.b16 %v606, %v605
      %v632 = vpack.c.b16 %v608, %v607
      %v633 = vpack.c.b16 %v610, %v609
      %v634 = vpack.c.b16 %v612, %v611
      %v635 = vpack.c.b16 %v614, %v613
      %v636 = vpack.c.b16 %v616, %v615
      %v637 = vpack.c.b16 %v618, %v617
      %v638 = vpack.c.b16 %v620, %v619
      %v639 = vpack.c.b16 %v622, %v621
      %v640 = vpack.c.b16 %v624, %v623
      %657 = vmatprep.subr.bf16.mxu0 0
      %658 = vmatpush1.bf16.msra.mxu0 %v625
      %659 = vmatprep.subr.bf16.mxu0 0
      %660 = vmatpush1.bf16.msra.mxu0 %v626
      %661 = vmatprep.subr.bf16.mxu0 0
      %662 = vmatpush1.bf16.msra.mxu0 %v627
      %663 = vmatprep.subr.bf16.mxu0 0
      %664 = vmatpush1.bf16.msra.mxu0 %v628
      %665 = vmatprep.subr.bf16.mxu0 0
      %666 = vmatpush1.bf16.msra.mxu0 %v629
      %667 = vmatprep.subr.bf16.mxu0 0
      %668 = vmatpush1.bf16.msra.mxu0 %v630
      %669 = vmatprep.subr.bf16.mxu0 0
      %670 = vmatpush1.bf16.msra.mxu0 %v631
      %671 = vmatprep.subr.bf16.mxu0 0
      %672 = vmatpush1.bf16.msra.mxu0 %v632
      %673 = vmatprep.subr.bf16.mxu0 0
      %674 = vmatpush1.bf16.msra.mxu0 %v633
      %675 = vmatprep.subr.bf16.mxu0 0
      %676 = vmatpush1.bf16.msra.mxu0 %v634
      %677 = vmatprep.subr.bf16.mxu0 0
      %678 = vmatpush1.bf16.msra.mxu0 %v635
      %679 = vmatprep.subr.bf16.mxu0 0
      %680 = vmatpush1.bf16.msra.mxu0 %v636
      %681 = vmatprep.subr.bf16.mxu0 0
      %682 = vmatpush1.bf16.msra.mxu0 %v637
      %683 = vmatprep.subr.bf16.mxu0 0
      %684 = vmatpush1.bf16.msra.mxu0 %v638
      %685 = vmatprep.subr.bf16.mxu0 0
      %686 = vmatpush1.bf16.msra.mxu0 %v639
      %687 = vmatprep.subr.bf16.mxu0 0
      %688 = vmatpush1.bf16.msra.mxu0 %v640
      %689 = vmatprep.mubr.bf16.mxu0 %v434
      %690 = vmatmul.mubr.bf16.gmra.mrb[0].mxu0 %v433
      %v691 = vpop.f32.mrb[0].mxu0
      %v692 = vadd.f32 0.0, %v691
      %v693 = vpop.f32.mrb[0].mxu0
      %v694 = vpop.f32.mrb[0].mxu0
      %v695 = vadd.f32 0.0, %v694
      %v696 = vpop.f32.mrb[0].mxu0
      %697 = vmatprep.mubr.bf16.mxu0 %v436
      %698 = vmatmul.mubr.bf16.gmra.mrb[0].mxu0 %v435
      %v699 = vpop.f32.mrb[0].mxu0
      %v700 = vadd.f32 0.0, %v699
      %v701 = vpop.f32.mrb[0].mxu0
      %v702 = vpop.f32.mrb[0].mxu0
      %v703 = vadd.f32 0.0, %v702
      %v704 = vpop.f32.mrb[0].mxu0
      %705 = vmatprep.mubr.bf16.mxu0 %v438
      %706 = vmatmul.mubr.bf16.gmra.mrb[0].mxu0 %v437
      %v707 = vpop.f32.mrb[0].mxu0
      %v708 = vadd.f32 0.0, %v707
      %v709 = vpop.f32.mrb[0].mxu0
      %v710 = vpop.f32.mrb[0].mxu0
      %v711 = vadd.f32 0.0, %v710
      %v712 = vpop.f32.mrb[0].mxu0
      %713 = vmatprep.mubr.bf16.mxu0 %v440
      %714 = vmatmul.mubr.bf16.gmra.mrb[0].mxu0 %v439
      %v715 = vpop.f32.mrb[0].mxu0
      %v716 = vadd.f32 0.0, %v715
      %v717 = vpop.f32.mrb[0].mxu0
      %v718 = vpop.f32.mrb[0].mxu0
      %v719 = vadd.f32 0.0, %v718
      %v720 = vpop.f32.mrb[0].mxu0
      %721 = vmatprep.mubr.bf16.mxu0 %v442
      %722 = vmatmul.mubr.bf16.gmra.mrb[0].mxu0 %v441
      %v723 = vpop.f32.mrb[0].mxu0
      %v724 = vadd.f32 0.0, %v723
      %v725 = vpop.f32.mrb[0].mxu0
      %v726 = vpop.f32.mrb[0].mxu0
      %v727 = vadd.f32 0.0, %v726
      %v728 = vpop.f32.mrb[0].mxu0
      %729 = vmatprep.mubr.bf16.mxu0 %v444
      %730 = vmatmul.mubr.bf16.gmra.mrb[0].mxu0 %v443
      %v731 = vpop.f32.mrb[0].mxu0
      %v732 = vadd.f32 0.0, %v731
      %v733 = vpop.f32.mrb[0].mxu0
      %v734 = vpop.f32.mrb[0].mxu0
      %v735 = vadd.f32 0.0, %v734
      %v736 = vpop.f32.mrb[0].mxu0
      %737 = vmatprep.mubr.bf16.mxu0 %v446
      %738 = vmatmul.mubr.bf16.gmra.mrb[0].mxu0 %v445
      %v739 = vpop.f32.mrb[0].mxu0
      %v740 = vadd.f32 0.0, %v739
      %v741 = vpop.f32.mrb[0].mxu0
      %v742 = vpop.f32.mrb[0].mxu0
      %v743 = vadd.f32 0.0, %v742
      %v744 = vpop.f32.mrb[0].mxu0
      %745 = vmatprep.mubr.bf16.mxu0 %v448
      %746 = vmatmul.mubr.bf16.gmra.mrb[0].mxu0 %v447
      %v747 = vpop.f32.mrb[0].mxu0
      %v748 = vadd.f32 0.0, %v747
      %v749 = vpop.f32.mrb[0].mxu0
      %v750 = vpop.f32.mrb[0].mxu0
      %v751 = vadd.f32 0.0, %v750
      %v752 = vpop.f32.mrb[0].mxu0
      %753 = vmatprep.mubr.bf16.mxu0 %v450
      %754 = vmatmul.mubr.bf16.gmra.mrb[0].mxu0 %v449
      %v755 = vpop.f32.mrb[0].mxu0
      %v756 = vadd.f32 0.0, %v755
      %v757 = vpop.f32.mrb[0].mxu0
      %v758 = vpop.f32.mrb[0].mxu0
      %v759 = vadd.f32 0.0, %v758
      %v760 = vpop.f32.mrb[0].mxu0
      %761 = vmatprep.mubr.bf16.mxu0 %v452
      %762 = vmatmul.mubr.bf16.gmra.mrb[0].mxu0 %v451
      %v763 = vpop.f32.mrb[0].mxu0
      %v764 = vadd.f32 0.0, %v763
      %v765 = vpop.f32.mrb[0].mxu0
      %v766 = vpop.f32.mrb[0].mxu0
      %v767 = vadd.f32 0.0, %v766
      %v768 = vpop.f32.mrb[0].mxu0
      %769 = vmatprep.mubr.bf16.mxu0 %v454
      %770 = vmatmul.mubr.bf16.gmra.mrb[0].mxu0 %v453
      %v771 = vpop.f32.mrb[0].mxu0
      %v772 = vadd.f32 0.0, %v771
      %v773 = vpop.f32.mrb[0].mxu0
      %v774 = vpop.f32.mrb[0].mxu0
      %v775 = vadd.f32 0.0, %v774
      %v776 = vpop.f32.mrb[0].mxu0
      %777 = vmatprep.mubr.bf16.mxu0 %v456
      %778 = vmatmul.mubr.bf16.gmra.mrb[0].mxu0 %v455
      %v779 = vpop.f32.mrb[0].mxu0
      %v780 = vadd.f32 0.0, %v779
      %v781 = vpop.f32.mrb[0].mxu0
      %v782 = vpop.f32.mrb[0].mxu0
      %v783 = vadd.f32 0.0, %v782
      %v784 = vpop.f32.mrb[0].mxu0
      %785 = vmatprep.mubr.bf16.mxu0 %v458
      %786 = vmatmul.mubr.bf16.gmra.mrb[0].mxu0 %v457
      %v787 = vpop.f32.mrb[0].mxu0
      %v788 = vadd.f32 0.0, %v787
      %v789 = vpop.f32.mrb[0].mxu0
      %v790 = vpop.f32.mrb[0].mxu0
      %v791 = vadd.f32 0.0, %v790
      %v792 = vpop.f32.mrb[0].mxu0
      %793 = vmatprep.mubr.bf16.mxu0 %v460
      %794 = vmatmul.mubr.bf16.gmra.mrb[0].mxu0 %v459
      %v795 = vpop.f32.mrb[0].mxu0
      %v796 = vadd.f32 0.0, %v795
      %v797 = vpop.f32.mrb[0].mxu0
      %v798 = vpop.f32.mrb[0].mxu0
      %v799 = vadd.f32 0.0, %v798
      %v800 = vpop.f32.mrb[0].mxu0
      %801 = vmatprep.mubr.bf16.mxu0 %v462
      %802 = vmatmul.mubr.bf16.gmra.mrb[0].mxu0 %v461
      %v803 = vpop.f32.mrb[0].mxu0
      %v804 = vadd.f32 0.0, %v803
      %v805 = vpop.f32.mrb[0].mxu0
      %v806 = vpop.f32.mrb[0].mxu0
      %v807 = vadd.f32 0.0, %v806
      %v808 = vpop.f32.mrb[0].mxu0
      %809 = vmatprep.mubr.bf16.mxu0 %v464
      %810 = vmatmul.mubr.bf16.gmra.mrb[0].mxu0 %v463
      %v811 = vpop.f32.mrb[0].mxu0
      %v812 = vadd.f32 0.0, %v811
      %v813 = vpop.f32.mrb[0].mxu0
      %v814 = vpop.f32.mrb[0].mxu0
      %v815 = vadd.f32 0.0, %v814
      %v816 = vpop.f32.mrb[0].mxu0
      %817 = vmatprep.mubr.bf16.mxu0 %v466
      %818 = vmatmul.mubr.bf16.gmra.mrb[0].mxu0 %v465
      %v819 = vpop.f32.mrb[0].mxu0
      %v820 = vadd.f32 0.0, %v819
      %v821 = vpop.f32.mrb[0].mxu0
      %v822 = vpop.f32.mrb[0].mxu0
      %v823 = vadd.f32 0.0, %v822
      %v824 = vpop.f32.mrb[0].mxu0
      %825 = vmatprep.mubr.bf16.mxu0 %v468
      %826 = vmatmul.mubr.bf16.gmra.mrb[0].mxu0 %v467
      %v827 = vpop.f32.mrb[0].mxu0
      %v828 = vadd.f32 0.0, %v827
      %v829 = vpop.f32.mrb[0].mxu0
      %v830 = vpop.f32.mrb[0].mxu0
      %v831 = vadd.f32 0.0, %v830
      %v832 = vpop.f32.mrb[0].mxu0
      %833 = vmatprep.mubr.bf16.mxu0 %v470
      %834 = vmatmul.mubr.bf16.gmra.mrb[0].mxu0 %v469
      %v835 = vpop.f32.mrb[0].mxu0
      %v836 = vadd.f32 0.0, %v835
      %v837 = vpop.f32.mrb[0].mxu0
      %v838 = vpop.f32.mrb[0].mxu0
      %v839 = vadd.f32 0.0, %v838
      %v840 = vpop.f32.mrb[0].mxu0
      %841 = vmatprep.mubr.bf16.mxu0 %v472
      %842 = vmatmul.mubr.bf16.gmra.mrb[0].mxu0 %v471
      %v843 = vpop.f32.mrb[0].mxu0
      %v844 = vadd.f32 0.0, %v843
      %v845 = vpop.f32.mrb[0].mxu0
      %v846 = vpop.f32.mrb[0].mxu0
      %v847 = vadd.f32 0.0, %v846
      %v848 = vpop.f32.mrb[0].mxu0
      %849 = vmatprep.mubr.bf16.mxu0 %v474
      %850 = vmatmul.mubr.bf16.gmra.mrb[0].mxu0 %v473
      %v851 = vpop.f32.mrb[0].mxu0
      %v852 = vadd.f32 0.0, %v851
      %v853 = vpop.f32.mrb[0].mxu0
      %v854 = vpop.f32.mrb[0].mxu0
      %v855 = vadd.f32 0.0, %v854
      %v856 = vpop.f32.mrb[0].mxu0
      %857 = vmatprep.mubr.bf16.mxu0 %v476
      %858 = vmatmul.mubr.bf16.gmra.mrb[0].mxu0 %v475
      %v859 = vpop.f32.mrb[0].mxu0
      %v860 = vadd.f32 0.0, %v859
      %v861 = vpop.f32.mrb[0].mxu0
      %v862 = vpop.f32.mrb[0].mxu0
      %v863 = vadd.f32 0.0, %v862
      %v864 = vpop.f32.mrb[0].mxu0
      %865 = vmatprep.mubr.bf16.mxu0 %v478
      %866 = vmatmul.mubr.bf16.gmra.mrb[0].mxu0 %v477
      %v867 = vpop.f32.mrb[0].mxu0
      %v868 = vadd.f32 0.0, %v867
      %v869 = vpop.f32.mrb[0].mxu0
      %v870 = vpop.f32.mrb[0].mxu0
      %v871 = vadd.f32 0.0, %v870
      %v872 = vpop.f32.mrb[0].mxu0
      %873 = vmatprep.mubr.bf16.mxu0 %v480
      %874 = vmatmul.mubr.bf16.gmra.mrb[0].mxu0 %v479
      %v875 = vpop.f32.mrb[0].mxu0
      %v876 = vadd.f32 0.0, %v875
      %v877 = vpop.f32.mrb[0].mxu0
      %v878 = vpop.f32.mrb[0].mxu0
      %v879 = vadd.f32 0.0, %v878
      %v880 = vpop.f32.mrb[0].mxu0
      %881 = vmatprep.mubr.bf16.mxu0 %v482
      %882 = vmatmul.mubr.bf16.gmra.mrb[0].mxu0 %v481
      %v883 = vpop.f32.mrb[0].mxu0
      %v884 = vadd.f32 0.0, %v883
      %v885 = vpop.f32.mrb[0].mxu0
      %v886 = vpop.f32.mrb[0].mxu0
      %v887 = vadd.f32 0.0, %v886
      %v888 = vpop.f32.mrb[0].mxu0
      %889 = vmatprep.mubr.bf16.mxu0 %v484
      %890 = vmatmul.mubr.bf16.gmra.mrb[0].mxu0 %v483
      %v891 = vpop.f32.mrb[0].mxu0
      %v892 = vadd.f32 0.0, %v891
      %v893 = vpop.f32.mrb[0].mxu0
      %v894 = vpop.f32.mrb[0].mxu0
      %v895 = vadd.f32 0.0, %v894
      %v896 = vpop.f32.mrb[0].mxu0
      %897 = vmatprep.mubr.bf16.mxu0 %v486
      %898 = vmatmul.mubr.bf16.gmra.mrb[0].mxu0 %v485
      %v899 = vpop.f32.mrb[0].mxu0
      %v900 = vadd.f32 0.0, %v899
      %v901 = vpop.f32.mrb[0].mxu0
      %v902 = vpop.f32.mrb[0].mxu0
      %v903 = vadd.f32 0.0, %v902
      %v904 = vpop.f32.mrb[0].mxu0
      %905 = vmatprep.mubr.bf16.mxu0 %v488
      %906 = vmatmul.mubr.bf16.gmra.mrb[0].mxu0 %v487
      %v907 = vpop.f32.mrb[0].mxu0
      %v908 = vadd.f32 0.0, %v907
      %v909 = vpop.f32.mrb[0].mxu0
      %v910 = vpop.f32.mrb[0].mxu0
      %v911 = vadd.f32 0.0, %v910
      %v912 = vpop.f32.mrb[0].mxu0
      %913 = vmatprep.mubr.bf16.mxu0 %v490
      %914 = vmatmul.mubr.bf16.gmra.mrb[0].mxu0 %v489
      %v915 = vpop.f32.mrb[0].mxu0
      %v916 = vadd.f32 0.0, %v915
      %v917 = vpop.f32.mrb[0].mxu0
      %v918 = vpop.f32.mrb[0].mxu0
      %v919 = vadd.f32 0.0, %v918
      %v920 = vpop.f32.mrb[0].mxu0
      %921 = vmatprep.mubr.bf16.mxu0 %v492
      %922 = vmatmul.mubr.bf16.gmra.mrb[0].mxu0 %v491
      %v923 = vpop.f32.mrb[0].mxu0
      %v924 = vadd.f32 0.0, %v923
      %v925 = vpop.f32.mrb[0].mxu0
      %v926 = vpop.f32.mrb[0].mxu0
      %v927 = vadd.f32 0.0, %v926
      %v928 = vpop.f32.mrb[0].mxu0
      %929 = vmatprep.mubr.bf16.mxu0 %v494
      %930 = vmatmul.mubr.bf16.gmra.mrb[0].mxu0 %v493
      %v931 = vpop.f32.mrb[0].mxu0
      %v932 = vadd.f32 0.0, %v931
      %v933 = vpop.f32.mrb[0].mxu0
      %v934 = vpop.f32.mrb[0].mxu0
      %v935 = vadd.f32 0.0, %v934
      %v936 = vpop.f32.mrb[0].mxu0
      %937 = vmatprep.mubr.bf16.mxu0 %v496
      %938 = vmatmul.mubr.bf16.gmra.mrb[0].mxu0 %v495
      %v939 = vpop.f32.mrb[0].mxu0
      %v940 = vadd.f32 0.0, %v939
      %v941 = vpop.f32.mrb[0].mxu0
      %v942 = vpop.f32.mrb[0].mxu0
      %v943 = vadd.f32 0.0, %v942
      %v944 = vpop.f32.mrb[0].mxu0
      %945 = vdwg.mxu0
      %v946 = vmul.f32 %v692, %v692
      %v947 = vmul.f32 %v695, %v695
      %v948 = vmul.f32 %v700, %v700
      %v949 = vmul.f32 %v703, %v703
      %v950 = vmul.f32 %v708, %v708
      %v951 = vmul.f32 %v711, %v711
      %v952 = vmul.f32 %v716, %v716
      %v953 = vmul.f32 %v719, %v719
      %v954 = vmul.f32 %v724, %v724
      %v955 = vmul.f32 %v727, %v727
      %v956 = vmul.f32 %v732, %v732
      %v957 = vmul.f32 %v735, %v735
      %v958 = vmul.f32 %v740, %v740
      %v959 = vmul.f32 %v743, %v743
      %v960 = vmul.f32 %v748, %v748
      %v961 = vmul.f32 %v751, %v751
      %v962 = vmul.f32 %v756, %v756
      %v963 = vmul.f32 %v759, %v759
      %v964 = vmul.f32 %v764, %v764
      %v965 = vmul.f32 %v767, %v767
      %v966 = vmul.f32 %v772, %v772
      %v967 = vmul.f32 %v775, %v775
      %v968 = vmul.f32 %v780, %v780
      %v969 = vmul.f32 %v783, %v783
      %v970 = vmul.f32 %v788, %v788
      %v971 = vmul.f32 %v791, %v791
      %v972 = vmul.f32 %v796, %v796
      %v973 = vmul.f32 %v799, %v799
      %v974 = vmul.f32 %v804, %v804
      %v975 = vmul.f32 %v807, %v807
      %v976 = vmul.f32 %v812, %v812
      %v977 = vmul.f32 %v815, %v815
      %v978 = vmul.f32 %v820, %v820
      %v979 = vmul.f32 %v823, %v823
      %v980 = vmul.f32 %v828, %v828
      %v981 = vmul.f32 %v831, %v831
      %v982 = vmul.f32 %v836, %v836
      %v983 = vmul.f32 %v839, %v839
      %v984 = vmul.f32 %v844, %v844
      %v985 = vmul.f32 %v847, %v847
      %v986 = vmul.f32 %v852, %v852
      %v987 = vmul.f32 %v855, %v855
      %v988 = vmul.f32 %v860, %v860
      %v989 = vmul.f32 %v863, %v863
      %v990 = vmul.f32 %v868, %v868
      %v991 = vmul.f32 %v871, %v871
      %v992 = vmul.f32 %v876, %v876
      %v993 = vmul.f32 %v879, %v879
      %v994 = vmul.f32 %v884, %v884
      %v995 = vmul.f32 %v887, %v887
      %v996 = vmul.f32 %v892, %v892
      %v997 = vmul.f32 %v895, %v895
      %v998 = vmul.f32 %v900, %v900
      %v999 = vmul.f32 %v903, %v903
      %v1000 = vmul.f32 %v908, %v908
      %v1001 = vmul.f32 %v911, %v911
      %v1002 = vmul.f32 %v916, %v916
      %v1003 = vmul.f32 %v919, %v919
      %v1004 = vmul.f32 %v924, %v924
      %v1005 = vmul.f32 %v927, %v927
      %v1006 = vmul.f32 %v932, %v932
      %v1007 = vmul.f32 %v935, %v935
      %v1008 = vmul.f32 %v940, %v940
      %v1009 = vmul.f32 %v943, %v943
      %v1010 = vadd.f32 %v946, %v978
      %v1011 = vadd.f32 %v947, %v979
      %v1012 = vadd.f32 %v948, %v980
      %v1013 = vadd.f32 %v949, %v981
      %v1014 = vadd.f32 %v950, %v982
      %v1015 = vadd.f32 %v951, %v983
      %v1016 = vadd.f32 %v952, %v984
      %v1017 = vadd.f32 %v953, %v985
      %v1018 = vadd.f32 %v954, %v986
      %v1019 = vadd.f32 %v955, %v987
      %v1020 = vadd.f32 %v956, %v988
      %v1021 = vadd.f32 %v957, %v989
      %v1022 = vadd.f32 %v958, %v990
      %v1023 = vadd.f32 %v959, %v991
      %v1024 = vadd.f32 %v960, %v992
      %v1025 = vadd.f32 %v961, %v993
      %v1026 = vadd.f32 %v962, %v994
      %v1027 = vadd.f32 %v963, %v995
      %v1028 = vadd.f32 %v964, %v996
      %v1029 = vadd.f32 %v965, %v997
      %v1030 = vadd.f32 %v966, %v998
      %v1031 = vadd.f32 %v967, %v999
      %v1032 = vadd.f32 %v968, %v1000
      %v1033 = vadd.f32 %v969, %v1001
      %v1034 = vadd.f32 %v970, %v1002
      %v1035 = vadd.f32 %v971, %v1003
      %v1036 = vadd.f32 %v972, %v1004
      %v1037 = vadd.f32 %v973, %v1005
      %v1038 = vadd.f32 %v974, %v1006
      %v1039 = vadd.f32 %v975, %v1007
      %v1040 = vadd.f32 %v976, %v1008
      %v1041 = vadd.f32 %v977, %v1009
      %v1042 = vmax.f32 %v1010, 1e-10
      %v1043 = vmax.f32 %v1011, 1e-10
      %v1044 = vmax.f32 %v1012, 1e-10
      %v1045 = vmax.f32 %v1013, 1e-10
      %v1046 = vmax.f32 %v1014, 1e-10
      %v1047 = vmax.f32 %v1015, 1e-10
      %v1048 = vmax.f32 %v1016, 1e-10
      %v1049 = vmax.f32 %v1017, 1e-10
      %v1050 = vmax.f32 %v1018, 1e-10
      %v1051 = vmax.f32 %v1019, 1e-10
      %v1052 = vmax.f32 %v1020, 1e-10
      %v1053 = vmax.f32 %v1021, 1e-10
      %v1054 = vmax.f32 %v1022, 1e-10
      %v1055 = vmax.f32 %v1023, 1e-10
      %v1056 = vmax.f32 %v1024, 1e-10
      %v1057 = vmax.f32 %v1025, 1e-10
      %v1058 = vmax.f32 %v1026, 1e-10
      %v1059 = vmax.f32 %v1027, 1e-10
      %v1060 = vmax.f32 %v1028, 1e-10
      %v1061 = vmax.f32 %v1029, 1e-10
      %v1062 = vmax.f32 %v1030, 1e-10
      %v1063 = vmax.f32 %v1031, 1e-10
      %v1064 = vmax.f32 %v1032, 1e-10
      %v1065 = vmax.f32 %v1033, 1e-10
      %v1066 = vmax.f32 %v1034, 1e-10
      %v1067 = vmax.f32 %v1035, 1e-10
      %v1068 = vmax.f32 %v1036, 1e-10
      %v1069 = vmax.f32 %v1037, 1e-10
      %v1070 = vmax.f32 %v1038, 1e-10
      %v1071 = vmax.f32 %v1039, 1e-10
      %v1072 = vmax.f32 %v1040, 1e-10
      %v1073 = vmax.f32 %v1041, 1e-10
      %v1074 = vlog2.pop %v1042
      %v1075 = vmul.f32 %v1074, 0.6931472
      %v1076 = vlog2.pop %v1043
      %v1077 = vmul.f32 %v1076, 0.6931472
      %v1078 = vlog2.pop %v1044
      %v1079 = vmul.f32 %v1078, 0.6931472
      %v1080 = vlog2.pop %v1045
      %v1081 = vmul.f32 %v1080, 0.6931472
      %v1082 = vlog2.pop %v1046
      %v1083 = vmul.f32 %v1082, 0.6931472
      %v1084 = vlog2.pop %v1047
      %v1085 = vmul.f32 %v1084, 0.6931472
      %v1086 = vlog2.pop %v1048
      %v1087 = vmul.f32 %v1086, 0.6931472
      %v1088 = vlog2.pop %v1049
      %v1089 = vmul.f32 %v1088, 0.6931472
      %v1090 = vlog2.pop %v1050
      %v1091 = vmul.f32 %v1090, 0.6931472
      %v1092 = vlog2.pop %v1051
      %v1093 = vmul.f32 %v1092, 0.6931472
      %v1094 = vlog2.pop %v1052
      %v1095 = vmul.f32 %v1094, 0.6931472
      %v1096 = vlog2.pop %v1053
      %v1097 = vmul.f32 %v1096, 0.6931472
      %v1098 = vlog2.pop %v1054
      %v1099 = vmul.f32 %v1098, 0.6931472
      %v1100 = vlog2.pop %v1055
      %v1101 = vmul.f32 %v1100, 0.6931472
      %v1102 = vlog2.pop %v1056
      %v1103 = vmul.f32 %v1102, 0.6931472
      %v1104 = vlog2.pop %v1057
      %v1105 = vmul.f32 %v1104, 0.6931472
      %v1106 = vlog2.pop %v1058
      %v1107 = vmul.f32 %v1106, 0.6931472
      %v1108 = vlog2.pop %v1059
      %v1109 = vmul.f32 %v1108, 0.6931472
      %v1110 = vlog2.pop %v1060
      %v1111 = vmul.f32 %v1110, 0.6931472
      %v1112 = vlog2.pop %v1061
      %v1113 = vmul.f32 %v1112, 0.6931472
      %v1114 = vlog2.pop %v1062
      %v1115 = vmul.f32 %v1114, 0.6931472
      %v1116 = vlog2.pop %v1063
      %v1117 = vmul.f32 %v1116, 0.6931472
      %v1118 = vlog2.pop %v1064
      %v1119 = vmul.f32 %v1118, 0.6931472
      %v1120 = vlog2.pop %v1065
      %v1121 = vmul.f32 %v1120, 0.6931472
      %v1122 = vlog2.pop %v1066
      %v1123 = vmul.f32 %v1122, 0.6931472
      %v1124 = vlog2.pop %v1067
      %v1125 = vmul.f32 %v1124, 0.6931472
      %v1126 = vlog2.pop %v1068
      %v1127 = vmul.f32 %v1126, 0.6931472
      %v1128 = vlog2.pop %v1069
      %v1129 = vmul.f32 %v1128, 0.6931472
      %v1130 = vlog2.pop %v1070
      %v1131 = vmul.f32 %v1130, 0.6931472
      %v1132 = vlog2.pop %v1071
      %v1133 = vmul.f32 %v1132, 0.6931472
      %v1134 = vlog2.pop %v1072
      %v1135 = vmul.f32 %v1134, 0.6931472
      %v1136 = vlog2.pop %v1073
      %v1137 = vmul.f32 %v1136, 0.6931472
      %v1138 = vmul.f32 %v1075, 4.3429446
      %v1139 = vmul.f32 %v1077, 4.3429446
      %v1140 = vmul.f32 %v1079, 4.3429446
      %v1141 = vmul.f32 %v1081, 4.3429446
      %v1142 = vmul.f32 %v1083, 4.3429446
      %v1143 = vmul.f32 %v1085, 4.3429446
      %v1144 = vmul.f32 %v1087, 4.3429446
      %v1145 = vmul.f32 %v1089, 4.3429446
      %v1146 = vmul.f32 %v1091, 4.3429446
      %v1147 = vmul.f32 %v1093, 4.3429446
      %v1148 = vmul.f32 %v1095, 4.3429446
      %v1149 = vmul.f32 %v1097, 4.3429446
      %v1150 = vmul.f32 %v1099, 4.3429446
      %v1151 = vmul.f32 %v1101, 4.3429446
      %v1152 = vmul.f32 %v1103, 4.3429446
      %v1153 = vmul.f32 %v1105, 4.3429446
      %v1154 = vmul.f32 %v1107, 4.3429446
      %v1155 = vmul.f32 %v1109, 4.3429446
      %v1156 = vmul.f32 %v1111, 4.3429446
      %v1157 = vmul.f32 %v1113, 4.3429446
      %v1158 = vmul.f32 %v1115, 4.3429446
      %v1159 = vmul.f32 %v1117, 4.3429446
      %v1160 = vmul.f32 %v1119, 4.3429446
      %v1161 = vmul.f32 %v1121, 4.3429446
      %v1162 = vmul.f32 %v1123, 4.3429446
      %v1163 = vmul.f32 %v1125, 4.3429446
      %v1164 = vmul.f32 %v1127, 4.3429446
      %v1165 = vmul.f32 %v1129, 4.3429446
      %v1166 = vmul.f32 %v1131, 4.3429446
      %v1167 = vmul.f32 %v1133, 4.3429446
      %v1168 = vmul.f32 %v1135, 4.3429446
      %v1169 = vmul.f32 %v1137, 4.3429446
      %v1170 = vmax.f32 %v1138, %v1142
      %v1171 = vmax.f32 %v1139, %v1143
      %v1172 = vmax.f32 %v1140, %v1144
      %v1173 = vmax.f32 %v1141, %v1145
      %v1174 = vmax.f32 %v1170, %v1146
      %v1175 = vmax.f32 %v1171, %v1147
      %v1176 = vmax.f32 %v1172, %v1148
      %v1177 = vmax.f32 %v1173, %v1149
      %v1178 = vmax.f32 %v1174, %v1150
      %v1179 = vmax.f32 %v1175, %v1151
      %v1180 = vmax.f32 %v1176, %v1152
      %v1181 = vmax.f32 %v1177, %v1153
      %v1182 = vmax.f32 %v1178, %v1154
      %v1183 = vmax.f32 %v1179, %v1155
      %v1184 = vmax.f32 %v1180, %v1156
      %v1185 = vmax.f32 %v1181, %v1157
      %v1186 = vmax.f32 %v1182, %v1158
      %v1187 = vmax.f32 %v1183, %v1159
      %v1188 = vmax.f32 %v1184, %v1160
      %v1189 = vmax.f32 %v1185, %v1161
      %v1190 = vmax.f32 %v1186, %v1162
      %v1191 = vmax.f32 %v1187, %v1163
      %v1192 = vmax.f32 %v1188, %v1164
      %v1193 = vmax.f32 %v1189, %v1165
      %v1194 = vmax.f32 %v1190, %v1166
      %v1195 = vmax.f32 %v1191, %v1167
      %v1196 = vmax.f32 %v1192, %v1168
      %v1197 = vmax.f32 %v1193, %v1169
      %v1198 = vmax.f32 %v1194, %v1195
      %v1199 = vmax.f32 %v1196, %v1197
      %v1200 = vmax.f32 %v1198, %v1199
      %1201 = vmax.xlane.f32.xlu0 %v1200
      %v1202 = vpop.xlane.xlu0 %1201
      %v1203 = vrot.slane %v1202, 4
      %v1204 = vmax.f32 %v1202, %v1203
      %v1205 = vrot.slane %v1204, 2
      %v1206 = vmax.f32 %v1204, %v1205
      %v1207 = vrot.slane %v1206, 1
      %v1208 = vmax.f32 %v1206, %v1207
      %s1209 = vtos %v1208
      %v1210 = vstv %s1209
      %v1211 = vsub.f32 %v1138, %v1210
      %v1212 = vsub.f32 %v1139, %v1210
      %v1213 = vsub.f32 %v1140, %v1210
      %v1214 = vsub.f32 %v1141, %v1210
      %v1215 = vsub.f32 %v1142, %v1210
      %v1216 = vsub.f32 %v1143, %v1210
      %v1217 = vsub.f32 %v1144, %v1210
      %v1218 = vsub.f32 %v1145, %v1210
      %v1219 = vsub.f32 %v1146, %v1210
      %v1220 = vsub.f32 %v1147, %v1210
      %v1221 = vsub.f32 %v1148, %v1210
      %v1222 = vsub.f32 %v1149, %v1210
      %v1223 = vsub.f32 %v1150, %v1210
      %v1224 = vsub.f32 %v1151, %v1210
      %v1225 = vsub.f32 %v1152, %v1210
      %v1226 = vsub.f32 %v1153, %v1210
      %v1227 = vsub.f32 %v1154, %v1210
      %v1228 = vsub.f32 %v1155, %v1210
      %v1229 = vsub.f32 %v1156, %v1210
      %v1230 = vsub.f32 %v1157, %v1210
      %v1231 = vsub.f32 %v1158, %v1210
      %v1232 = vsub.f32 %v1159, %v1210
      %v1233 = vsub.f32 %v1160, %v1210
      %v1234 = vsub.f32 %v1161, %v1210
      %v1235 = vsub.f32 %v1162, %v1210
      %v1236 = vsub.f32 %v1163, %v1210
      %v1237 = vsub.f32 %v1164, %v1210
      %v1238 = vsub.f32 %v1165, %v1210
      %v1239 = vsub.f32 %v1166, %v1210
      %v1240 = vsub.f32 %v1167, %v1210
      %v1241 = vsub.f32 %v1168, %v1210
      %v1242 = vsub.f32 %v1169, %v1210
      %v1243 = vmax.f32 %v1211, -80.0
      %v1244 = vmax.f32 %v1212, -80.0
      %v1245 = vmax.f32 %v1213, -80.0
      %v1246 = vmax.f32 %v1214, -80.0
      %v1247 = vmax.f32 %v1215, -80.0
      %v1248 = vmax.f32 %v1216, -80.0
      %v1249 = vmax.f32 %v1217, -80.0
      %v1250 = vmax.f32 %v1218, -80.0
      %v1251 = vmax.f32 %v1219, -80.0
      %v1252 = vmax.f32 %v1220, -80.0
      %v1253 = vmax.f32 %v1221, -80.0
      %v1254 = vmax.f32 %v1222, -80.0
      %v1255 = vmax.f32 %v1223, -80.0
      %v1256 = vmax.f32 %v1224, -80.0
      %v1257 = vmax.f32 %v1225, -80.0
      %v1258 = vmax.f32 %v1226, -80.0
      %v1259 = vmax.f32 %v1227, -80.0
      %v1260 = vmax.f32 %v1228, -80.0
      %v1261 = vmax.f32 %v1229, -80.0
      %v1262 = vmax.f32 %v1230, -80.0
      %v1263 = vmax.f32 %v1231, -80.0
      %v1264 = vmax.f32 %v1232, -80.0
      %v1265 = vmax.f32 %v1233, -80.0
      %v1266 = vmax.f32 %v1234, -80.0
      %v1267 = vmax.f32 %v1235, -80.0
      %v1268 = vmax.f32 %v1236, -80.0
      %v1269 = vmax.f32 %v1237, -80.0
      %v1270 = vmax.f32 %v1238, -80.0
      %v1271 = vmax.f32 %v1239, -80.0
      %v1272 = vmax.f32 %v1240, -80.0
      %v1273 = vmax.f32 %v1241, -80.0
      %v1274 = vmax.f32 %v1242, -80.0
      %1275 = vst [vmem:[%s143] sm:$0xff] %v1243
      %1276 = vst [vmem:[%s143 + $0x8] sm:$0xff] %v1244
      %1277 = vst [vmem:[%s143 + $0x10] sm:$0xff] %v1245
      %1278 = vst [vmem:[%s143 + $0x18] sm:$0xff] %v1246
      %1279 = vst [vmem:[%s143 + $0x20] sm:$0xff] %v1247
      %1280 = vst [vmem:[%s143 + $0x28] sm:$0xff] %v1248
      %1281 = vst [vmem:[%s143 + $0x30] sm:$0xff] %v1249
      %1282 = vst [vmem:[%s143 + $0x38] sm:$0xff] %v1250
      %1283 = vst [vmem:[%s143 + $0x40] sm:$0xff] %v1251
      %1284 = vst [vmem:[%s143 + $0x48] sm:$0xff] %v1252
      %1285 = vst [vmem:[%s143 + $0x50] sm:$0xff] %v1253
      %1286 = vst [vmem:[%s143 + $0x58] sm:$0xff] %v1254
      %1287 = vst [vmem:[%s143 + $0x60] sm:$0xff] %v1255
      %1288 = vst [vmem:[%s143 + $0x68] sm:$0xff] %v1256
      %1289 = vst [vmem:[%s143 + $0x70] sm:$0xff] %v1257
      %1290 = vst [vmem:[%s143 + $0x78] sm:$0xff] %v1258
      %1291 = vst [vmem:[%s143 + $0x80] sm:$0xff] %v1259
      %1292 = vst [vmem:[%s143 + $0x88] sm:$0xff] %v1260
      %1293 = vst [vmem:[%s143 + $0x90] sm:$0xff] %v1261
      %1294 = vst [vmem:[%s143 + $0x98] sm:$0xff] %v1262
      %1295 = vst [vmem:[%s143 + $0xa0] sm:$0xff] %v1263
      %1296 = vst [vmem:[%s143 + $0xa8] sm:$0xff] %v1264
      %1297 = vst [vmem:[%s143 + $0xb0] sm:$0xff] %v1265
      %1298 = vst [vmem:[%s143 + $0xb8] sm:$0xff] %v1266
      %1299 = vst [vmem:[%s143 + $0xc0] sm:$0xff] %v1267
      %1300 = vst [vmem:[%s143 + $0xc8] sm:$0xff] %v1268
      %1301 = vst [vmem:[%s143 + $0xd0] sm:$0xff] %v1269
      %1302 = vst [vmem:[%s143 + $0xd8] sm:$0xff] %v1270
      %1303 = vst [vmem:[%s143 + $0xe0] sm:$0xff] %v1271
      %1304 = vst [vmem:[%s143 + $0xe8] sm:$0xff] %v1272
      %1305 = vst [vmem:[%s143 + $0xf0] sm:$0xff] %v1273
      %1306 = vst [vmem:[%s143 + $0xf8] sm:$0xff] %v1274
      %p1307 = scmp.lt.s32.totalorder %s13, 1
      %s1308 = scalar_select %p1307, %s13, 1
      %s1309 = smul.addr %s1308, 32
      %s1310 = smul.addr %s1309, 8
      %s1311 = scalar_lea.vmem %s2, %s1310
      // Predicated region
      $region29: #{spectrogram.1} parent=27 // pred_check
        %p1312 = pneg %p78
      $region30: #{spectrogram.1} parent=27 // pred_check_branch
        %1314 = sbr.rel (%p1312) target = $region32
      $region31: #{spectrogram.1} parent=27 // pred_region
        _
      $region32: #{spectrogram.1} parent=27 // pred_fallthru
        _
    $region28: #{spectrogram.1} parent=5 // pred_fallthru
      _
    %p1315 = scmp.le.s32.totalorder 2, %s8
    // Predicated region
    $region33: #{spectrogram.1} parent=5 // pred_check
      %p1316 = pneg %p1315
    $region34: #{spectrogram.1} parent=5 // pred_check_branch
      %1318 = sbr.rel (%p1316) target = $region36
    $region35: #{spectrogram.1} parent=5 // pred_region
      %s1319 = ssub.s32 %s8, 2
      // Predicated region
      $region37: #{spectrogram.1} parent=35 // pred_check
        %p1320 = pneg %p84
      $region38: #{spectrogram.1} parent=35 // pred_check_branch
        %1322 = sbr.rel (%p1320) target = $region40
      $region39: #{spectrogram.1} parent=35 // pred_region
        %p1323 = scmp.lt.s32.totalorder %s14, 1
        %s1324 = scalar_select %p1323, %s14, 1
        %s1325 = smul.addr %s1324, 32
        %s1326 = smul.addr %s1325, 8
        %s1327 = scalar_lea.vmem %s2, %s1326
      $region40: #{spectrogram.1} parent=35 // pred_fallthru
        _
    $region36: #{spectrogram.1} parent=5 // pred_fallthru
      _
  $region6: #{spectrogram.1} parent=0 // loop_footer
    %s12 = sadd.s32 1, %s8
  $region7: #{spectrogram.1} parent=0 // loop_footer_branch
    %7 = sbr.rel target = $region3
  $region8: #{spectrogram.1} parent=0 // loop_exit
    _

</llo_original>
